<compile_context>
chip_gen: v7x
topology: tpu7x:2x2x1
jax: 0.10.0
libtpu: 0.0.40
codegen_flags: <defaults>
</compile_context>

<pallas_src>
from functools import partial

import jax
import jax.numpy as jnp
from jax import lax
from jax.experimental import pallas as pl
from jax.experimental.pallas import tpu as pltpu


# ----------------------------- Pallas kernel ---------------------------------
def _qk_matmul_kernel(scale_ref,      # SMEM [1]  scalar scale
                      q_ref,          # VMEM [1, C, T]
                      k_ref,          # VMEM [1, C, S]
                      w_ref):         # VMEM [1, T, S]
    q = q_ref[0]                      # [C, T]
    k = k_ref[0]                      # [C, S]
    # out[t, s] = sum_c q[c, t] * k[c, s]   (MXU, f32 accumulation)
    logits = lax.dot_general(
        q, k,
        dimension_numbers=(((0,), (0,)), ((), ())),
        preferred_element_type=jnp.float32,
    )                                 # [T, S]
    s = scale_ref[0]
    w_ref[0] = (logits * (s * s)).astype(w_ref.dtype)


def quant_qk_matmul_pallas(q, k, scale):
    """weight = einsum('bct,bcs->bts', q*scale, k*scale) via Pallas."""
    B, C, T = q.shape
    _, _, S = k.shape
    scale_arr = jnp.asarray(scale, jnp.float32).reshape((1,))

    return pl.pallas_call(
        _qk_matmul_kernel,
        out_shape=jax.ShapeDtypeStruct((B, T, S), jnp.float32),
        grid=(B,),
        in_specs=[
            pl.BlockSpec(memory_space=pltpu.MemorySpace.SMEM),       # scale
            pl.BlockSpec((1, C, T), lambda b: (b, 0, 0)),            # q
            pl.BlockSpec((1, C, S), lambda b: (b, 0, 0)),            # k
        ],
        out_specs=pl.BlockSpec((1, T, S), lambda b: (b, 0, 0)),
        compiler_params=pltpu.CompilerParams(
            dimension_semantics=("parallel",)),                      # megacore on v7x
    )(scale_arr, q, k)


# -------------------------- pure-JAX reference --------------------------------
def quant_qk_matmul_reference(q, k, scale):
    # Mirrors the PyTorch default (use_act_quant=False) path exactly.
    return jnp.einsum('bct,bcs->bts', q * scale, k * scale)


# ---------------------------------- demo --------------------------------------
if __name__ == "__main__":
    B, C, T, S = 2, 32, 128, 128   # batch*heads, head channels, q tokens, k tokens

    key = jax.random.PRNGKey(0)
    kq, kk = jax.random.split(key)
    q = jax.random.normal(kq, (B, C, T), jnp.float32)
    k = jax.random.normal(kk, (B, C, S), jnp.float32)
    # Typical external setting: (q*scale)·(k*scale) == q·k / sqrt(C)
    scale = jnp.float32(float(C) ** -0.25)

    fwd_pallas = jax.jit(quant_qk_matmul_pallas)
    fwd_ref = jax.jit(quant_qk_matmul_reference)

    out = jax.block_until_ready(fwd_pallas(q, k, scale))
    ref = jax.block_until_ready(fwd_ref(q, k, scale))

    assert out.shape == (B, T, S), out.shape
    assert bool(jnp.all(jnp.isfinite(out)))
    max_err = float(jnp.max(jnp.abs(out - ref)))
    assert max_err < 2e-3, f"mismatch vs pure-JAX reference: {max_err}"
    print("KERNEL_OK")
</pallas_src>

<mosaic_0001>
module attributes {stable_mosaic.version = 11 : i64} {
  func.func @_qk_matmul_kernel(%arg0: i32, %arg1: memref<1xf32, #tpu.memory_space<smem>>, %arg2: memref<1x32x128xf32, #tpu.memory_space<vmem>>, %arg3: memref<1x32x128xf32, #tpu.memory_space<vmem>>, %arg4: memref<1x128x128xf32, #tpu.memory_space<vmem>>) attributes {dimension_semantics = [#tpu.dimension_semantics<parallel>], iteration_bounds = array<i64: 2>, scalar_prefetch = 0 : i64, scratch_operands = 0 : i64, tpu.core_type = #tpu.core_type<tc>, window_params = [{transform_indices = @transform_0, window_bounds = array<i64: 1>}, {transform_indices = @transform_1, window_bounds = array<i64: 1, 32, 128>}, {transform_indices = @transform_2, window_bounds = array<i64: 1, 32, 128>}, {transform_indices = @transform_3, window_bounds = array<i64: 1, 128, 128>}]} {
    %c0 = arith.constant 0 : index
    %c0_0 = arith.constant 0 : index
    %c0_1 = arith.constant 0 : index
    %0 = vector.load %arg2[%c0, %c0_0, %c0_1] : memref<1x32x128xf32, #tpu.memory_space<vmem>>, vector<1x32x128xf32>
    %1 = vector.shape_cast %0 : vector<1x32x128xf32> to vector<32x128xf32>
    %c0_2 = arith.constant 0 : index
    %c0_3 = arith.constant 0 : index
    %c0_4 = arith.constant 0 : index
    %2 = vector.load %arg3[%c0_2, %c0_3, %c0_4] : memref<1x32x128xf32, #tpu.memory_space<vmem>>, vector<1x32x128xf32>
    %3 = vector.shape_cast %2 : vector<1x32x128xf32> to vector<32x128xf32>
    %cst = arith.constant dense<0.000000e+00> : vector<128x128xf32>
    %4 = tpu.matmul %1, %3, %cst {dimension_numbers = #tpu.dot_dimension_numbers<[0], [0], [1], [1], [0, 1, 1, 1], [], []>} : vector<32x128xf32>, vector<32x128xf32>, vector<128x128xf32> -> vector<128x128xf32>
    %c0_5 = arith.constant 0 : index
    %5 = memref.load %arg1[%c0_5] : memref<1xf32, #tpu.memory_space<smem>>
    %6 = arith.mulf %5, %5 : f32
    %7 = vector.broadcast %6 : f32 to vector<128x128xf32>
    %8 = arith.mulf %4, %7 : vector<128x128xf32>
    %c0_6 = arith.constant 0 : index
    %c0_7 = arith.constant 0 : index
    %c0_8 = arith.constant 0 : index
    %9 = vector.load %arg4[%c0_6, %c0_7, %c0_8] : memref<1x128x128xf32, #tpu.memory_space<vmem>>, vector<1x128x128xf32>
    %10 = vector.shape_cast %9 : vector<1x128x128xf32> to vector<128x128xf32>
    %11 = vector.shape_cast %8 : vector<128x128xf32> to vector<1x128x128xf32>
    tpu.vector_store %arg4[%c0_6, %c0_7, %c0_8], %11 {strides = array<i32>} : memref<1x128x128xf32, #tpu.memory_space<vmem>>, vector<1x128x128xf32>,
    return
  }
  func.func @transform_0(%arg0: i32) -> i32 {
    %c0_i32 = arith.constant 0 : i32
    %c0_i32_0 = arith.constant 0 : i32
    return %c0_i32 : i32
  }
  func.func @transform_1(%arg0: i32) -> (i32, i32, i32) {
    %c0_i32 = arith.constant 0 : i32
    %c0_i32_0 = arith.constant 0 : i32
    %c0_i32_1 = arith.constant 0 : i32
    return %arg0, %c0_i32, %c0_i32_0 : i32, i32, i32
  }
  func.func @transform_2(%arg0: i32) -> (i32, i32, i32) {
    %c0_i32 = arith.constant 0 : i32
    %c0_i32_0 = arith.constant 0 : i32
    %c0_i32_1 = arith.constant 0 : i32
    return %arg0, %c0_i32, %c0_i32_0 : i32, i32, i32
  }
  func.func @transform_3(%arg0: i32) -> (i32, i32, i32) {
    %c0_i32 = arith.constant 0 : i32
    %c0_i32_0 = arith.constant 0 : i32
    %c0_i32_1 = arith.constant 0 : i32
    return %arg0, %c0_i32, %c0_i32_0 : i32, i32, i32
  }
}

</mosaic_0001>

<llo_original>
// kernel: quant_qk_matmul_pallas.1
$region0: #{quant_qk_matmul_pallas.1}
  #allocation0 [shape = 'u32[]', space=smem, size = 0x4, offset = 0x4, fixed_abs, tag = 'smem constant byte address 0x4 - core index']
  #allocation1 [shape = 'u32[144,128]{1,0:T(1,128)}', space=vmem, size = 0x12000, scoped, tag = 'internal scratch']
  #allocation2 [shape = 'f32[1]{0:T(128)S(6)}', space=smem, size = 0x200, scoped, tag = 'scoped memory for quant_qk_matmul_pallas.1']
  %s0 = inlined_call_operand.<no memory space> [shape: f32[1], index: 0, kind: input, shape index: {}]
  %s1 = inlined_call_operand.hbm [shape: f32[2,32,128], index: 1, kind: input, shape index: {}]
  %s2 = inlined_call_operand.hbm [shape: f32[2,32,128], index: 2, kind: input, shape index: {}]
  %s3 = inlined_call_operand.hbm [shape: f32[2,128,128], index: 3, kind: output, shape index: {}]
  %s4 = sld [smem:[#allocation0]]
  $region53: #{quant_qk_matmul_pallas.1} parent=0
    _
  %s6 = ssub.s32 1, %s4
  %s7 = scalar_select 0, %s6, %s4
  %8 = sst [smem:[#allocation2]] %s0
  $region1: #{quant_qk_matmul_pallas.1} parent=0
    #allocation3 [shape = 'u8[32768]{0}', space=vmem, size = 0x8000, scoped, tag = 'input window, operand 1']
    #allocation4 [shape = 's32[2]{0}', space=sflag, size = 0x8, scoped, tag = 'scoped memory for quant_qk_matmul_pallas.1']
    #allocation5 [shape = 's32[2]{0}', space=sflag, size = 0x8, scoped, tag = 'scoped memory for quant_qk_matmul_pallas.1']
    #allocation6 [shape = 'u8[32768]{0}', space=vmem, size = 0x8000, scoped, tag = 'input window, operand 2']
    #allocation7 [shape = 's32[2]{0}', space=sflag, size = 0x8, scoped, tag = 'scoped memory for quant_qk_matmul_pallas.1']
    #allocation8 [shape = 'u8[131072]{0}', space=vmem, size = 0x20000, scoped, tag = 'output window, operand 0']
    %9 = vsyncpa [#allocation4], 0
    %s10 = scalar_lea.sflag [#allocation4], 1
    %11 = vsyncpa %s10, 0
    %12 = vsyncpa [#allocation7], 0
    %s13 = scalar_lea.sflag [#allocation7], 1
    %14 = vsyncpa %s13, 0
    %15 = vsyncpa [#allocation5], 0
    %s16 = scalar_lea.sflag [#allocation5], 1
    %17 = vsyncpa %s16, 0
    loop: start=0, step=1, limit=4
    $region2: #{quant_qk_matmul_pallas.1} parent=1 // loop_pre_header
      _
    $region3: #{quant_qk_matmul_pallas.1} parent=1 // loop_header
      %s19 = sphi 0, %s23
      %p20 = scmp.ge.s32.totalorder %s19, 4
      %s27 = sphi 0, %s27
      %s29 = sphi 0, %s27
      %s30 = sphi 0, %s29
      %s44 = sphi 0, %s30
      %s50 = sphi 0, %s52
      %s53 = sphi 0, %s50
      %s54 = sphi 0, %s53
      %s70 = sphi 0, %s54
      %s76 = sphi 0, %s78
      %s79 = sphi 0, %s76
      %s80 = sphi 0, %s79
      %s96 = sphi 0, %s80
      %s102 = sphi 0, %s104
      %s105 = sphi 0, %s102
      %s106 = sphi 0, %s105
      %s122 = sphi 0, %s106
    $region4: #{quant_qk_matmul_pallas.1} parent=1 // loop_header_branch
      %22 = sbr.rel (%p20) target = $region8
    $region5: #{quant_qk_matmul_pallas.1} parent=1 // loop_body
      %s24 = ssub.s32 %s19, 1
      %s25 = ssub.s32 %s19, 2
      %s26 = sadd.s32 %s19, 1
      %s28 = sadd.s32 %s27, 1
      %p31 = scmp.eq.s32.totalorder %s19, 1
      %p32 = scmp.ne.s32.totalorder %s27, %s29
      %p33 = scmp.eq.s32.totalorder %s19, 0
      %p34 = por %p32, %p33
      %p35 = scmp.ne.s32.totalorder %s27, %s29
      %p36 = scmp.eq.s32.totalorder %s24, 1
      %p37 = por %p35, %p36
      %p38 = scmp.ne.s32.totalorder %s29, %s30
      %p39 = scmp.eq.s32.totalorder %s24, 0
      %p40 = por %p38, %p39
      %p41 = scmp.ne.s32.totalorder %s29, %s30
      %p42 = scmp.eq.s32.totalorder %s25, 1
      %p43 = por %p41, %p42
      %p45 = scmp.ne.s32.totalorder %s30, %s44
      %p46 = scmp.eq.s32.totalorder %s25, 0
      %p47 = por %p45, %p46
      %s48 = ssub.s32 %s19, %s26
      %p49 = scmp.eq.s32.totalorder %s48, 0
      %s51 = sadd.s32 %s50, 1
      %s52 = scalar_select %p49, %s50, %s51
      %p55 = pneg %p49
      %p56 = scmp.eq.s32.totalorder %s19, 1
      %p57 = por %p55, %p56
      %p58 = scmp.ne.s32.totalorder %s50, %s53
      %p59 = scmp.eq.s32.totalorder %s19, 0
      %p60 = por %p58, %p59
      %p61 = scmp.ne.s32.totalorder %s50, %s53
      %p62 = scmp.eq.s32.totalorder %s24, 1
      %p63 = por %p61, %p62
      %p64 = scmp.ne.s32.totalorder %s53, %s54
      %p65 = scmp.eq.s32.totalorder %s24, 0
      %p66 = por %p64, %p65
      %p67 = scmp.ne.s32.totalorder %s53, %s54
      %p68 = scmp.eq.s32.totalorder %s25, 1
      %p69 = por %p67, %p68
      %p71 = scmp.ne.s32.totalorder %s54, %s70
      %p72 = scmp.eq.s32.totalorder %s25, 0
      %p73 = por %p71, %p72
      %s74 = ssub.s32 %s19, %s26
      %p75 = scmp.eq.s32.totalorder %s74, 0
      %s77 = sadd.s32 %s76, 1
      %s78 = scalar_select %p75, %s76, %s77
      %p81 = pneg %p75
      %p82 = scmp.eq.s32.totalorder %s19, 1
      %p83 = por %p81, %p82
      %p84 = scmp.ne.s32.totalorder %s76, %s79
      %p85 = scmp.eq.s32.totalorder %s19, 0
      %p86 = por %p84, %p85
      %p87 = scmp.ne.s32.totalorder %s76, %s79
      %p88 = scmp.eq.s32.totalorder %s24, 1
      %p89 = por %p87, %p88
      %p90 = scmp.ne.s32.totalorder %s79, %s80
      %p91 = scmp.eq.s32.totalorder %s24, 0
      %p92 = por %p90, %p91
      %p93 = scmp.ne.s32.totalorder %s79, %s80
      %p94 = scmp.eq.s32.totalorder %s25, 1
      %p95 = por %p93, %p94
      %p97 = scmp.ne.s32.totalorder %s80, %s96
      %p98 = scmp.eq.s32.totalorder %s25, 0
      %p99 = por %p97, %p98
      %s100 = ssub.s32 %s19, %s26
      %p101 = scmp.eq.s32.totalorder %s100, 0
      %s103 = sadd.s32 %s102, 1
      %s104 = scalar_select %p101, %s102, %s103
      %p107 = pneg %p101
      %p108 = scmp.eq.s32.totalorder %s19, 1
      %p109 = por %p107, %p108
      %p110 = scmp.ne.s32.totalorder %s102, %s105
      %p111 = scmp.eq.s32.totalorder %s19, 0
      %p112 = por %p110, %p111
      %p113 = scmp.ne.s32.totalorder %s102, %s105
      %p114 = scmp.eq.s32.totalorder %s24, 1
      %p115 = por %p113, %p114
      %p116 = scmp.ne.s32.totalorder %s105, %s106
      %p117 = scmp.eq.s32.totalorder %s24, 0
      %p118 = por %p116, %p117
      %p119 = scmp.ne.s32.totalorder %s105, %s106
      %p120 = scmp.eq.s32.totalorder %s25, 1
      %p121 = por %p119, %p120
      %p123 = scmp.ne.s32.totalorder %s106, %s122
      %p124 = scmp.eq.s32.totalorder %s25, 0
      %p125 = por %p123, %p124
      %p126 = scmp.le.s32.totalorder 1, %s19
      %p127 = scmp.lt.s32.totalorder %s19, 3
      %p128 = pnand %p126, %p127
      %p129 = pneg %p128
      // Predicated region
      $region9: #{quant_qk_matmul_pallas.1} parent=5 // pred_check
        _
      $region10: #{quant_qk_matmul_pallas.1} parent=5 // pred_check_branch
        %131 = sbr.rel (%p128) target = $region12
      $region11: #{quant_qk_matmul_pallas.1} parent=5 // pred_region
        %s132 = ssub.s32 %s19, 1
        // Predicated region
        $region13: #{quant_qk_matmul_pallas.1} parent=11 // pred_check
          %p133 = pneg %p40
        $region14: #{quant_qk_matmul_pallas.1} parent=11 // pred_check_branch
          %135 = sbr.rel (%p133) target = $region16
        $region15: #{quant_qk_matmul_pallas.1} parent=11 // pred_region
          _
        $region16: #{quant_qk_matmul_pallas.1} parent=11 // pred_fallthru
          _
      $region12: #{quant_qk_matmul_pallas.1} parent=5 // pred_fallthru
        _
      %p136 = scmp.lt.s32.totalorder %s19, 2
      // Predicated region
      $region17: #{quant_qk_matmul_pallas.1} parent=5 // pred_check
        %p137 = pneg %p136
      $region18: #{quant_qk_matmul_pallas.1} parent=5 // pred_check_branch
        %139 = sbr.rel (%p137) target = $region20
      $region19: #{quant_qk_matmul_pallas.1} parent=5 // pred_region
        // Predicated region
        $region21: #{quant_qk_matmul_pallas.1} parent=19 // pred_check
          %p140 = pneg %p60
        $region22: #{quant_qk_matmul_pallas.1} parent=19 // pred_check_branch
          %142 = sbr.rel (%p140) target = $region24
        $region23: #{quant_qk_matmul_pallas.1} parent=19 // pred_region
          %s143 = sand.u32 %s50, 1
          %s144 = scalar_lea.sflag [#allocation4], %s143
          %s145 = sand.u32 %s50, 1
          %s146 = smul.addr %s145, 32
          %s147 = scalar_lea.vmem [#allocation3], %s146
          %s149 = ssub.s32 512, 512
          %150 = vsyncadd %s144, %s149
          %s151 = smul.addr %s19, 4
          %s152 = smul.addr %s151, 128
          %s153 = scalar_lea.hbm %s1, %s152
          %s154 = sshll.u32 %s147, 4
          %s155 = int_to_ptr.vmem [resolvable:$true] %s154
          %160 = dma.hbm_to_vmem [thread:$0]  %s153, 512, %s155, %s144, 128, 128, 8
        $region24: #{quant_qk_matmul_pallas.1} parent=19 // pred_fallthru
          _
        // Predicated region
        $region25: #{quant_qk_matmul_pallas.1} parent=19 // pred_check
          %p161 = pneg %p86
        $region26: #{quant_qk_matmul_pallas.1} parent=19 // pred_check_branch
          %163 = sbr.rel (%p161) target = $region28
        $region27: #{quant_qk_matmul_pallas.1} parent=19 // pred_region
          %s164 = sand.u32 %s76, 1
          %s165 = scalar_lea.sflag [#allocation7], %s164
          %s166 = sand.u32 %s76, 1
          %s167 = smul.addr %s166, 32
          %s168 = scalar_lea.vmem [#allocation6], %s167
          %s170 = ssub.s32 512, 512
          %171 = vsyncadd %s165, %s170
          %s172 = smul.addr %s19, 4
          %s173 = smul.addr %s172, 128
          %s174 = scalar_lea.hbm %s2, %s173
          %s175 = sshll.u32 %s168, 4
          %s176 = int_to_ptr.vmem [resolvable:$true] %s175
          %181 = dma.hbm_to_vmem [thread:$0]  %s174, 512, %s176, %s165, 128, 128, 8
        $region28: #{quant_qk_matmul_pallas.1} parent=19 // pred_fallthru
          _
      $region20: #{quant_qk_matmul_pallas.1} parent=5 // pred_fallthru
        _
      %p182 = scmp.le.s32.totalorder 1, %s19
      %p183 = scmp.lt.s32.totalorder %s19, 3
      %p184 = pnand %p182, %p183
      %p185 = pneg %p184
      // Predicated region
      $region29: #{quant_qk_matmul_pallas.1} parent=5 // pred_check
        _
      $region30: #{quant_qk_matmul_pallas.1} parent=5 // pred_check_branch
        %187 = sbr.rel (%p184) target = $region32
      $region31: #{quant_qk_matmul_pallas.1} parent=5 // pred_region
        %s188 = ssub.s32 %s19, 1
        %s189 = sand.u32 %s53, 1
        %s190 = scalar_lea.sflag [#allocation4], %s189
        %s191 = sand.u32 %s53, 1
        %s192 = smul.addr %s191, 32
        %s193 = scalar_lea.vmem [#allocation3], %s192
        // Predicated region
        $region33: #{quant_qk_matmul_pallas.1} parent=31 // pred_check
          %p194 = pneg %p66
        $region34: #{quant_qk_matmul_pallas.1} parent=31 // pred_check_branch
          %196 = sbr.rel (%p194) target = $region36
        $region35: #{quant_qk_matmul_pallas.1} parent=31 // pred_region
          %197 = dma.done %s190, 512
        $region36: #{quant_qk_matmul_pallas.1} parent=31 // pred_fallthru
          _
        %s198 = sand.u32 %s79, 1
        %s199 = scalar_lea.sflag [#allocation7], %s198
        %s200 = sand.u32 %s79, 1
        %s201 = smul.addr %s200, 32
        %s202 = scalar_lea.vmem [#allocation6], %s201
        // Predicated region
        $region37: #{quant_qk_matmul_pallas.1} parent=31 // pred_check
          %p203 = pneg %p92
        $region38: #{quant_qk_matmul_pallas.1} parent=31 // pred_check_branch
          %205 = sbr.rel (%p203) target = $region40
        $region39: #{quant_qk_matmul_pallas.1} parent=31 // pred_region
          %206 = dma.done %s199, 512
        $region40: #{quant_qk_matmul_pallas.1} parent=31 // pred_fallthru
          _
        %p207 = pneg %p40
        %p208 = pneg %p37
        %s209 = sand.u32 %s53, 1
        %s210 = scalar_lea.sflag [#allocation4], %s209
        %s211 = sand.u32 %s53, 1
        %s212 = smul.addr %s211, 32
        %s213 = scalar_lea.vmem [#allocation3], %s212
        %p214 = pneg %p66
        %p215 = pneg %p63
        %s216 = sand.u32 %s79, 1
        %s217 = scalar_lea.sflag [#allocation7], %s216
        %s218 = sand.u32 %s79, 1
        %s219 = smul.addr %s218, 32
        %s220 = scalar_lea.vmem [#allocation6], %s219
        %p221 = pneg %p92
        %p222 = pneg %p89
        %p223 = pneg %p118
        %p224 = pneg %p115
        %s225 = sand.u32 %s105, 1
        %s226 = scalar_lea.sflag [#allocation5], %s225
        %s227 = sand.u32 %s105, 1
        %s228 = smul.addr %s227, 128
        %s229 = scalar_lea.vmem [#allocation8], %s228
        %v230 = vld [vmem:[%s193] sm:$0xff]
        %v231 = vld [vmem:[%s193 + $0x8] sm:$0xff]
        %v232 = vld [vmem:[%s193 + $0x10] sm:$0xff]
        %v233 = vld [vmem:[%s193 + $0x18] sm:$0xff]
        %v234 = vld [vmem:[%s202] sm:$0xff]
        %v235 = vld [vmem:[%s202 + $0x8] sm:$0xff]
        %v236 = vld [vmem:[%s202 + $0x10] sm:$0xff]
        %v237 = vld [vmem:[%s202 + $0x18] sm:$0xff]
        %238 = vxpose.xlu0.b32.start [1/16] %v230, 128
        %239 = vxpose.xlu0.b32.cont [2/16] %v231, 128
        %240 = vxpose.xlu0.b32.cont [3/16] %v232, 128
        %241 = vxpose.xlu0.b32.cont [4/16] %v233, 128
        %242 = vxpose.xlu0.b32.cont [5/16] 0.0, 128
        %243 = vxpose.xlu0.b32.cont [6/16] 0.0, 128
        %244 = vxpose.xlu0.b32.cont [7/16] 0.0, 128
        %245 = vxpose.xlu0.b32.cont [8/16] 0.0, 128
        %246 = vxpose.xlu0.b32.cont [9/16] 0.0, 128
        %247 = vxpose.xlu0.b32.cont [10/16] 0.0, 128
        %248 = vxpose.xlu0.b32.cont [11/16] 0.0, 128
        %249 = vxpose.xlu0.b32.cont [12/16] 0.0, 128
        %250 = vxpose.xlu0.b32.cont [13/16] 0.0, 128
        %251 = vxpose.xlu0.b32.cont [14/16] 0.0, 128
        %252 = vxpose.xlu0.b32.cont [15/16] 0.0, 128
        %253 = vxpose.xlu0.b32.end [16/16] 0.0, 128
        %v254 = vpop.trf.xlu0
        %v255 = vpop.trf.xlu0
        %v256 = vpop.trf.xlu0
        %v257 = vpop.trf.xlu0
        %v258 = vpop.trf.xlu0
        %v259 = vpop.trf.xlu0
        %v260 = vpop.trf.xlu0
        %v261 = vpop.trf.xlu0
        %v262 = vpop.trf.xlu0
        %v263 = vpop.trf.xlu0
        %v264 = vpop.trf.xlu0
        %v265 = vpop.trf.xlu0
        %v266 = vpop.trf.xlu0
        %v267 = vpop.trf.xlu0
        %v268 = vpop.trf.xlu0
        %v269 = vpop.trf.xlu0
        %vm270 = vcmask 261120
        %v272 = vsel %vm270, %v254, 0
        %v275 = vsel %vm270, %v255, 0
        %v278 = vsel %vm270, %v256, 0
        %v281 = vsel %vm270, %v257, 0
        %v284 = vsel %vm270, %v258, 0
        %v287 = vsel %vm270, %v259, 0
        %v290 = vsel %vm270, %v260, 0
        %v293 = vsel %vm270, %v261, 0
        %v296 = vsel %vm270, %v262, 0
        %v299 = vsel %vm270, %v263, 0
        %v302 = vsel %vm270, %v264, 0
        %v305 = vsel %vm270, %v265, 0
        %v308 = vsel %vm270, %v266, 0
        %v311 = vsel %vm270, %v267, 0
        %v314 = vsel %vm270, %v268, 0
        %v317 = vsel %vm270, %v269, 0
        %319 = vmatprep.subr.mxu0 0.0
        %320 = vmatpush1.msra.mxu0 %v234
        %321 = vmatprep.subr.mxu0 0.0
        %322 = vmatpush1.msra.mxu0 %v235
        %323 = vmatprep.subr.mxu0 0.0
        %324 = vmatpush1.msra.mxu0 %v236
        %325 = vmatprep.subr.mxu0 0.0
        %326 = vmatpush1.msra.mxu0 %v237
        %327 = vmatprep.subr.mxu0 0.0
        %328 = vmatpush1.msra.mxu0 0.0
        %329 = vmatprep.subr.mxu0 0.0
        %330 = vmatpush1.msra.mxu0 0.0
        %331 = vmatprep.subr.mxu0 0.0
        %332 = vmatpush1.msra.mxu0 0.0
        %333 = vmatprep.subr.mxu0 0.0
        %334 = vmatpush1.msra.mxu0 0.0
        %335 = vmatprep.subr.mxu0 0.0
        %336 = vmatpush1.msra.mxu0 0.0
        %337 = vmatprep.subr.mxu0 0.0
        %338 = vmatpush1.msra.mxu0 0.0
        %339 = vmatprep.subr.mxu0 0.0
        %340 = vmatpush1.msra.mxu0 0.0
        %341 = vmatprep.subr.mxu0 0.0
        %342 = vmatpush1.msra.mxu0 0.0
        %343 = vmatprep.subr.mxu0 0.0
        %344 = vmatpush1.msra.mxu0 0.0
        %345 = vmatprep.subr.mxu0 0.0
        %346 = vmatpush1.msra.mxu0 0.0
        %347 = vmatprep.subr.mxu0 0.0
        %348 = vmatpush1.msra.mxu0 0.0
        %349 = vmatprep.subr.mxu0 0.0
        %350 = vmatpush1.msra.mxu0 0.0
        %351 = vmatprep.subr.mxu0 0.0
        %352 = vmatpush1.msra.mxu0 0.0
        %353 = vmatprep.subr.mxu0 0.0
        %354 = vmatpush1.msra.mxu0 0.0
        %355 = vmatprep.subr.mxu0 0.0
        %356 = vmatpush1.msra.mxu0 0.0
        %357 = vmatprep.subr.mxu0 0.0
        %358 = vmatpush1.msra.mxu0 0.0
        %359 = vmatprep.subr.mxu0 0.0
        %360 = vmatpush1.msra.mxu0 0.0
        %361 = vmatprep.subr.mxu0 0.0
        %362 = vmatpush1.msra.mxu0 0.0
        %363 = vmatprep.subr.mxu0 0.0
        %364 = vmatpush1.msra.mxu0 0.0
        %365 = vmatprep.subr.mxu0 0.0
        %366 = vmatpush1.msra.mxu0 0.0
        %367 = vmatprep.subr.mxu0 0.0
        %368 = vmatpush1.msra.mxu0 0.0
        %369 = vmatprep.subr.mxu0 0.0
        %370 = vmatpush1.msra.mxu0 0.0
        %371 = vmatprep.subr.mxu0 0.0
        %372 = vmatpush1.msra.mxu0 0.0
        %373 = vmatprep.subr.mxu0 0.0
        %374 = vmatpush1.msra.mxu0 0.0
        %375 = vmatprep.subr.mxu0 0.0
        %376 = vmatpush1.msra.mxu0 0.0
        %377 = vmatprep.subr.mxu0 0.0
        %378 = vmatpush1.msra.mxu0 0.0
        %379 = vmatprep.subr.mxu0 0.0
        %380 = vmatpush1.msra.mxu0 0.0
        %381 = vmatprep.subr.mxu0 0.0
        %382 = vmatpush1.msra.mxu0 0.0
        %383 = vmatprep.mubr.f32.mxu0 0.0
        %384 = vmatmul.mubr.f32.gmra.mrb[0].mxu0 %v272
        %v385 = vpop.f32.mrb[0].mxu0
        %v386 = vadd.f32 0.0, %v385
        %v387 = vpop.f32.mrb[0].mxu0
        %388 = vmatprep.mubr.f32.mxu0 0.0
        %389 = vmatmul.mubr.f32.gmra.mrb[0].mxu0 %v275
        %v390 = vpop.f32.mrb[0].mxu0
        %v391 = vadd.f32 0.0, %v390
        %v392 = vpop.f32.mrb[0].mxu0
        %393 = vmatprep.mubr.f32.mxu0 0.0
        %394 = vmatmul.mubr.f32.gmra.mrb[0].mxu0 %v278
        %v395 = vpop.f32.mrb[0].mxu0
        %v396 = vadd.f32 0.0, %v395
        %v397 = vpop.f32.mrb[0].mxu0
        %398 = vmatprep.mubr.f32.mxu0 0.0
        %399 = vmatmul.mubr.f32.gmra.mrb[0].mxu0 %v281
        %v400 = vpop.f32.mrb[0].mxu0
        %v401 = vadd.f32 0.0, %v400
        %v402 = vpop.f32.mrb[0].mxu0
        %403 = vmatprep.mubr.f32.mxu0 0.0
        %404 = vmatmul.mubr.f32.gmra.mrb[0].mxu0 %v284
        %v405 = vpop.f32.mrb[0].mxu0
        %v406 = vadd.f32 0.0, %v405
        %v407 = vpop.f32.mrb[0].mxu0
        %408 = vmatprep.mubr.f32.mxu0 0.0
        %409 = vmatmul.mubr.f32.gmra.mrb[0].mxu0 %v287
        %v410 = vpop.f32.mrb[0].mxu0
        %v411 = vadd.f32 0.0, %v410
        %v412 = vpop.f32.mrb[0].mxu0
        %413 = vmatprep.mubr.f32.mxu0 0.0
        %414 = vmatmul.mubr.f32.gmra.mrb[0].mxu0 %v290
        %v415 = vpop.f32.mrb[0].mxu0
        %v416 = vadd.f32 0.0, %v415
        %v417 = vpop.f32.mrb[0].mxu0
        %418 = vmatprep.mubr.f32.mxu0 0.0
        %419 = vmatmul.mubr.f32.gmra.mrb[0].mxu0 %v293
        %v420 = vpop.f32.mrb[0].mxu0
        %v421 = vadd.f32 0.0, %v420
        %v422 = vpop.f32.mrb[0].mxu0
        %423 = vmatprep.mubr.f32.mxu0 0.0
        %424 = vmatmul.mubr.f32.gmra.mrb[0].mxu0 %v296
        %v425 = vpop.f32.mrb[0].mxu0
        %v426 = vadd.f32 0.0, %v425
        %v427 = vpop.f32.mrb[0].mxu0
        %428 = vmatprep.mubr.f32.mxu0 0.0
        %429 = vmatmul.mubr.f32.gmra.mrb[0].mxu0 %v299
        %v430 = vpop.f32.mrb[0].mxu0
        %v431 = vadd.f32 0.0, %v430
        %v432 = vpop.f32.mrb[0].mxu0
        %433 = vmatprep.mubr.f32.mxu0 0.0
        %434 = vmatmul.mubr.f32.gmra.mrb[0].mxu0 %v302
        %v435 = vpop.f32.mrb[0].mxu0
        %v436 = vadd.f32 0.0, %v435
        %v437 = vpop.f32.mrb[0].mxu0
        %438 = vmatprep.mubr.f32.mxu0 0.0
        %439 = vmatmul.mubr.f32.gmra.mrb[0].mxu0 %v305
        %v440 = vpop.f32.mrb[0].mxu0
        %v441 = vadd.f32 0.0, %v440
        %v442 = vpop.f32.mrb[0].mxu0
        %443 = vmatprep.mubr.f32.mxu0 0.0
        %444 = vmatmul.mubr.f32.gmra.mrb[0].mxu0 %v308
        %v445 = vpop.f32.mrb[0].mxu0
        %v446 = vadd.f32 0.0, %v445
        %v447 = vpop.f32.mrb[0].mxu0
        %448 = vmatprep.mubr.f32.mxu0 0.0
        %449 = vmatmul.mubr.f32.gmra.mrb[0].mxu0 %v311
        %v450 = vpop.f32.mrb[0].mxu0
        %v451 = vadd.f32 0.0, %v450
        %v452 = vpop.f32.mrb[0].mxu0
        %453 = vmatprep.mubr.f32.mxu0 0.0
        %454 = vmatmul.mubr.f32.gmra.mrb[0].mxu0 %v314
        %v455 = vpop.f32.mrb[0].mxu0
        %v456 = vadd.f32 0.0, %v455
        %v457 = vpop.f32.mrb[0].mxu0
        %458 = vmatprep.mubr.f32.mxu0 0.0
        %459 = vmatmul.mubr.f32.gmra.mrb[0].mxu0 %v317
        %v460 = vpop.f32.mrb[0].mxu0
        %v461 = vadd.f32 0.0, %v460
        %v462 = vpop.f32.mrb[0].mxu0
        %463 = vdwg.mxu0
        %s464 = sld [smem:[#allocation2]]
        %s465 = smul.f32 %s464, %s464
        %v466 = vstv %s465
        %v467 = vmul.f32 %v386, %v466
        %v468 = vmul.f32 %v391, %v466
        %v469 = vmul.f32 %v396, %v466
        %v470 = vmul.f32 %v401, %v466
        %v471 = vmul.f32 %v406, %v466
        %v472 = vmul.f32 %v411, %v466
        %v473 = vmul.f32 %v416, %v466
        %v474 = vmul.f32 %v421, %v466
        %v475 = vmul.f32 %v426, %v466
        %v476 = vmul.f32 %v431, %v466
        %v477 = vmul.f32 %v436, %v466
        %v478 = vmul.f32 %v441, %v466
        %v479 = vmul.f32 %v446, %v466
        %v480 = vmul.f32 %v451, %v466
        %v481 = vmul.f32 %v456, %v466
        %v482 = vmul.f32 %v461, %v466
        %483 = vst [vmem:[%s229] sm:$0xff] %v467
        %484 = vst [vmem:[%s229 + $0x8] sm:$0xff] %v468
        %485 = vst [vmem:[%s229 + $0x10] sm:$0xff] %v469
        %486 = vst [vmem:[%s229 + $0x18] sm:$0xff] %v470
        %487 = vst [vmem:[%s229 + $0x20] sm:$0xff] %v471
        %488 = vst [vmem:[%s229 + $0x28] sm:$0xff] %v472
        %489 = vst [vmem:[%s229 + $0x30] sm:$0xff] %v473
        %490 = vst [vmem:[%s229 + $0x38] sm:$0xff] %v474
        %491 = vst [vmem:[%s229 + $0x40] sm:$0xff] %v475
        %492 = vst [vmem:[%s229 + $0x48] sm:$0xff] %v476
        %493 = vst [vmem:[%s229 + $0x50] sm:$0xff] %v477
        %494 = vst [vmem:[%s229 + $0x58] sm:$0xff] %v478
        %495 = vst [vmem:[%s229 + $0x60] sm:$0xff] %v479
        %496 = vst [vmem:[%s229 + $0x68] sm:$0xff] %v480
        %497 = vst [vmem:[%s229 + $0x70] sm:$0xff] %v481
        %498 = vst [vmem:[%s229 + $0x78] sm:$0xff] %v482
        %s499 = sand.u32 %s105, 1
        %s500 = scalar_lea.sflag [#allocation5], %s499
        %s501 = sand.u32 %s105, 1
        %s502 = smul.addr %s501, 128
        %s503 = scalar_lea.vmem [#allocation8], %s502
        // Predicated region
        $region41: #{quant_qk_matmul_pallas.1} parent=31 // pred_check
          %p504 = pneg %p115
        $region42: #{quant_qk_matmul_pallas.1} parent=31 // pred_check_branch
          %506 = sbr.rel (%p504) target = $region44
        $region43: #{quant_qk_matmul_pallas.1} parent=31 // pred_region
          %s508 = ssub.s32 2048, 2048
          %509 = vsyncadd %s500, %s508
          %s510 = smul.addr %s24, 16
          %s511 = smul.addr %s510, 128
          %s512 = scalar_lea.hbm %s3, %s511
          %s513 = sshll.u32 %s503, 4
          %s514 = int_to_ptr.vmem [resolvable:$true] %s513
          %519 = dma.vmem_to_hbm [thread:$0]  %s514, 2048, %s512, %s500, 128, 128, 8
        $region44: #{quant_qk_matmul_pallas.1} parent=31 // pred_fallthru
          _
      $region32: #{quant_qk_matmul_pallas.1} parent=5 // pred_fallthru
        _
      %p520 = scmp.le.s32.totalorder 2, %s19
      // Predicated region
      $region45: #{quant_qk_matmul_pallas.1} parent=5 // pred_check
        %p521 = pneg %p520
      $region46: #{quant_qk_matmul_pallas.1} parent=5 // pred_check_branch
        %523 = sbr.rel (%p521) target = $region48
      $region47: #{quant_qk_matmul_pallas.1} parent=5 // pred_region
        %s524 = ssub.s32 %s19, 2
        // Predicated region
        $region49: #{quant_qk_matmul_pallas.1} parent=47 // pred_check
          %p525 = pneg %p121
        $region50: #{quant_qk_matmul_pallas.1} parent=47 // pred_check_branch
          %527 = sbr.rel (%p525) target = $region52
        $region51: #{quant_qk_matmul_pallas.1} parent=47 // pred_region
          %s528 = sand.u32 %s106, 1
          %s529 = scalar_lea.sflag [#allocation5], %s528
          %s530 = sand.u32 %s106, 1
          %s531 = smul.addr %s530, 128
          %s532 = scalar_lea.vmem [#allocation8], %s531
          %533 = dma.done %s529, 2048
        $region52: #{quant_qk_matmul_pallas.1} parent=47 // pred_fallthru
          _
      $region48: #{quant_qk_matmul_pallas.1} parent=5 // pred_fallthru
        _
    $region6: #{quant_qk_matmul_pallas.1} parent=1 // loop_footer
      %s23 = sadd.s32 1, %s19
    $region7: #{quant_qk_matmul_pallas.1} parent=1 // loop_footer_branch
      %18 = sbr.rel target = $region3
    $region8: #{quant_qk_matmul_pallas.1} parent=1 // loop_exit
      _
    %534 = vsyncpa [#allocation4], 1
    %s535 = scalar_lea.sflag [#allocation4], 1
    %536 = vsyncpa %s535, 1
    %537 = vsyncpa [#allocation7], 1
    %s538 = scalar_lea.sflag [#allocation7], 1
    %539 = vsyncpa %s538, 1
    %540 = vsyncpa [#allocation5], 1
    %s541 = scalar_lea.sflag [#allocation5], 1
    %542 = vsyncpa %s541, 1

</llo_original>
